<compile_context>
chip_gen: v7x
topology: tpu7x:2x2x1
jax: 0.10.0
libtpu: 0.0.40
codegen_flags: <defaults>
</compile_context>

<pallas_src>
import jax
import jax.numpy as jnp
from jax import lax
from jax.experimental import pallas as pl
from jax.experimental.pallas import tpu as pltpu


# ----------------------------- helpers -----------------------------

def _round_up(x, m):
    return (x + m - 1) // m * m


def _pick_tiles(B, D):
    """Pick sublane/lane aligned tile sizes and padded problem sizes."""
    if B <= 128:
        Bp = _round_up(B, 8)          # f32 sublane multiple
        tm = Bp
    else:
        Bp = _round_up(B, 128)
        tm = 128
    Dp = _round_up(D, 128)            # lane multiple -> lane-dense stores
    tn = 256 if (Dp >= 256 and Dp % 256 == 0) else 128
    if Dp >= 512 and Dp % 512 == 0:
        tk = 512
    elif Dp >= 256 and Dp % 256 == 0:
        tk = 256
    else:
        tk = 128
    return Bp, Dp, tm, tn, tk


def _pad2(a, rows, cols):
    pr, pc = rows - a.shape[0], cols - a.shape[1]
    if pr or pc:
        a = jnp.pad(a, ((0, pr), (0, pc)))
    return a


# ----------------------------- kernels -----------------------------

def _linear_kernel(x_ref, w_ref, b_ref, y_ref, acc_ref):
    # y = x @ W.T + b, W kept in PyTorch (out, in) layout.
    k = pl.program_id(2)

    @pl.when(k == 0)
    def _():
        acc_ref[...] = jnp.zeros_like(acc_ref)

    acc_ref[...] += lax.dot_general(
        x_ref[...], w_ref[...],
        dimension_numbers=(((1,), (1,)), ((), ())),   # contract in-dim of both
        preferred_element_type=jnp.float32,
    )

    @pl.when(k == pl.num_programs(2) - 1)
    def _():
        y_ref[...] = (acc_ref[...] + b_ref[...].astype(jnp.float32)).astype(y_ref.dtype)


def _fused_kernel(x_ref, w_ref, b_ref, t_ref, y_ref, s_ref, acc_ref, ssum_ref):
    # Linear as above, plus |x - target| partial sums accumulated in SMEM and
    # emitted as a broadcast (8, 128) tile per (i, j) output block.
    k = pl.program_id(2)
    nk = pl.num_programs(2)

    @pl.when(k == 0)
    def _():
        acc_ref[...] = jnp.zeros_like(acc_ref)
        ssum_ref[0] = jnp.float32(0.0)

    x = x_ref[...]
    acc_ref[...] += lax.dot_general(
        x, w_ref[...],
        dimension_numbers=(((1,), (1,)), ((), ())),
        preferred_element_type=jnp.float32,
    )

    # Surprise is computed on the pre-linear input x vs target (f32), matching
    # the PyTorch layer. Rides the free VPU slots under the MXU matmul.
    diff = jnp.abs(x.astype(jnp.float32) - t_ref[...].astype(jnp.float32))
    ssum_ref[0] += jnp.sum(diff)

    @pl.when(k == nk - 1)
    def _():
        y_ref[...] = (acc_ref[...] + b_ref[...].astype(jnp.float32)).astype(y_ref.dtype)
        s_ref[...] = jnp.full(s_ref.shape, ssum_ref[0], dtype=jnp.float32)


# ----------------------------- wrapper -----------------------------

def surprise_minimization_forward(x, weight, bias, target=None):
    """x: (B, D); weight: (D, D) PyTorch (out, in) layout; bias: (D,)."""
    B, D = x.shape
    Bp, Dp, tm, tn, tk = _pick_tiles(B, D)
    nbi, nbj, nbk = Bp // tm, Dp // tn, Dp // tk
    grid = (nbi, nbj, nbk)

    xp = _pad2(x, Bp, Dp)
    wp = _pad2(weight, Dp, Dp)                       # no transpose, zero pad
    bp = bias if Dp == D else jnp.pad(bias, (0, Dp - D))
    bp = bp.reshape(1, Dp)

    x_spec = pl.BlockSpec((tm, tk), lambda i, j, k: (i, k))
    w_spec = pl.BlockSpec((tn, tk), lambda i, j, k: (j, k))
    b_spec = pl.BlockSpec((1, tn), lambda i, j, k: (0, j))
    y_spec = pl.BlockSpec((tm, tn), lambda i, j, k: (i, j))

    compiler_params = pltpu.CompilerParams(
        dimension_semantics=("parallel", "parallel", "arbitrary"),
        vmem_limit_bytes=32 * 1024 * 1024,
    )

    if target is None:
        cost = pl.CostEstimate(
            flops=2 * Bp * Dp * Dp, transcendentals=0,
            bytes_accessed=4 * (2 * Bp * Dp + Dp * Dp + Dp))
        y_pad = pl.pallas_call(
            _linear_kernel,
            out_shape=jax.ShapeDtypeStruct((Bp, Dp), x.dtype),
            grid_spec=pltpu.PrefetchScalarGridSpec(
                num_scalar_prefetch=0,
                grid=grid,
                in_specs=[x_spec, w_spec, b_spec],
                out_specs=y_spec,
                scratch_shapes=[pltpu.VMEM((tm, tn), jnp.float32)],
            ),
            compiler_params=compiler_params,
            cost_estimate=cost,
        )(xp, wp, bp)
        return y_pad[:B, :D], jnp.float32(0.0)

    tp = _pad2(target, Bp, Dp)
    t_spec = pl.BlockSpec((tm, tk), lambda i, j, k: (i, k))
    s_spec = pl.BlockSpec((8, 128), lambda i, j, k: (i, j))
    cost = pl.CostEstimate(
        flops=2 * Bp * Dp * Dp, transcendentals=0,
        bytes_accessed=4 * (3 * Bp * Dp + Dp * Dp + Dp))

    y_pad, s_part = pl.pallas_call(
        _fused_kernel,
        out_shape=(
            jax.ShapeDtypeStruct((Bp, Dp), x.dtype),
            jax.ShapeDtypeStruct((nbi * 8, nbj * 128), jnp.float32),
        ),
        grid_spec=pltpu.PrefetchScalarGridSpec(
            num_scalar_prefetch=0,
            grid=grid,
            in_specs=[x_spec, w_spec, b_spec, t_spec],
            out_specs=(y_spec, s_spec),
            scratch_shapes=[
                pltpu.VMEM((tm, tn), jnp.float32),   # matmul accumulator
                pltpu.SMEM((1,), jnp.float32),       # running |x-t| sum over k
            ],
        ),
        compiler_params=compiler_params,
        cost_estimate=cost,
    )(xp, wp, bp, tp)

    # Each (i, j) block of s_part holds the full row-block-i |x-t| sum, so the
    # per-i sum is replicated nbj times; representatives live at [8i, 128j].
    reps = s_part[0::8, 0::128]                       # (nbi, nbj)
    surprise = (jnp.sum(reps) / jnp.float32(nbj * B * D)).astype(jnp.float32)
    return y_pad[:B, :D], surprise


# ----------------------------- params -----------------------------

def init_linear_params(key, input_dim, dtype=jnp.float32):
    # Deterministic init mimicking nn.Linear: U(-1/sqrt(in), 1/sqrt(in))
    kw, kb = jax.random.split(key)
    bound = 1.0 / (input_dim ** 0.5)
    weight = jax.random.uniform(kw, (input_dim, input_dim), dtype,
                                minval=-bound, maxval=bound)
    bias = jax.random.uniform(kb, (input_dim,), dtype,
                              minval=-bound, maxval=bound)
    return weight, bias


# ----------------------------- main -----------------------------

if __name__ == "__main__":
    key = jax.random.PRNGKey(0)
    k_param, k_x, k_t = jax.random.split(key, 3)

    batch, input_dim = 8, 32
    weight, bias = init_linear_params(k_param, input_dim)
    x = jax.random.normal(k_x, (batch, input_dim), jnp.float32)
    target = jax.random.normal(k_t, (batch, input_dim), jnp.float32)

    # With target: fused kernel returns (fc(x), mean |x - target|)
    y, surprise = surprise_minimization_forward(x, weight, bias, target)
    jax.block_until_ready((y, surprise))

    y_ref = x @ weight.T + bias
    s_ref = jnp.mean(jnp.abs(x - target))
    assert jnp.allclose(y, y_ref, atol=1e-5), "linear mismatch"
    assert jnp.allclose(surprise, s_ref, atol=1e-6, rtol=1e-6), "surprise mismatch"

    # Without target: returns (fc(x), 0.0)
    y2, surprise2 = surprise_minimization_forward(x, weight, bias, None)
    jax.block_until_ready(y2)
    assert jnp.allclose(y2, y_ref, atol=1e-5), "linear (no target) mismatch"
    assert float(surprise2) == 0.0

    # Larger shape exercising the multi-block (j, k) tiled path.
    b2, d2 = 16, 384
    w2, bb2 = init_linear_params(jax.random.PRNGKey(1), d2)
    x2 = jax.random.normal(jax.random.PRNGKey(2), (b2, d2), jnp.float32)
    t2 = jax.random.normal(jax.random.PRNGKey(3), (b2, d2), jnp.float32)
    y3, s3 = surprise_minimization_forward(x2, w2, bb2, t2)
    jax.block_until_ready((y3, s3))
    assert jnp.allclose(y3, x2 @ w2.T + bb2, atol=1e-4, rtol=1e-4), "tiled linear mismatch"
    assert jnp.allclose(s3, jnp.mean(jnp.abs(x2 - t2)), atol=1e-5, rtol=1e-5), "tiled surprise mismatch"

    print("KERNEL_OK")
</pallas_src>

<mosaic_0001>
module attributes {stable_mosaic.version = 11 : i64} {
  func.func @_fused_kernel(%arg0: i32, %arg1: i32, %arg2: i32, %arg3: memref<8x128xf32, #tpu.memory_space<vmem>>, %arg4: memref<128x128xf32, #tpu.memory_space<vmem>>, %arg5: memref<1x128xf32, #tpu.memory_space<vmem>>, %arg6: memref<8x128xf32, #tpu.memory_space<vmem>>, %arg7: memref<8x128xf32, #tpu.memory_space<vmem>>, %arg8: memref<8x128xf32, #tpu.memory_space<vmem>>, %arg9: memref<8x128xf32, #tpu.memory_space<vmem>>, %arg10: memref<1xf32, #tpu.memory_space<smem>>) attributes {dimension_semantics = [#tpu.dimension_semantics<parallel>, #tpu.dimension_semantics<parallel>, #tpu.dimension_semantics<arbitrary>], iteration_bounds = array<i64: 1, 1, 1>, scalar_prefetch = 0 : i64, scratch_operands = 2 : i64, tpu.core_type = #tpu.core_type<tc>, window_params = [{transform_indices = @transform_0, window_bounds = array<i64: 8, 128>}, {transform_indices = @transform_1, window_bounds = array<i64: 128, 128>}, {transform_indices = @transform_2, window_bounds = array<i64: 1, 128>}, {transform_indices = @transform_3, window_bounds = array<i64: 8, 128>}, {transform_indices = @transform_4, window_bounds = array<i64: 8, 128>}, {transform_indices = @transform_5, window_bounds = array<i64: 8, 128>}]} {
    %c0_i32 = arith.constant 0 : i32
    %0 = arith.cmpi eq, %arg2, %c0_i32 : i32
    %1 = arith.extui %0 : i1 to i32
    %c0_i32_0 = arith.constant 0 : i32
    %2 = arith.cmpi ne, %1, %c0_i32_0 : i32
    scf.if %2 {
      %cst_15 = arith.constant 0.000000e+00 : f32
      %22 = vector.broadcast %cst_15 : f32 to vector<8x128xf32>
      %c0_16 = arith.constant 0 : index
      %c0_17 = arith.constant 0 : index
      %23 = vector.load %arg9[%c0_16, %c0_17] : memref<8x128xf32, #tpu.memory_space<vmem>>, vector<8x128xf32>
      tpu.vector_store %arg9[%c0_16, %c0_17], %22 {strides = array<i32>} : memref<8x128xf32, #tpu.memory_space<vmem>>, vector<8x128xf32>,
      %cst_18 = arith.constant 0.000000e+00 : f32
      %c0_19 = arith.constant 0 : index
      %24 = memref.load %arg10[%c0_19] : memref<1xf32, #tpu.memory_space<smem>>
      memref.store %cst_18, %arg10[%c0_19] : memref<1xf32, #tpu.memory_space<smem>>
    } else {
    }
    %c0 = arith.constant 0 : index
    %c0_1 = arith.constant 0 : index
    %3 = vector.load %arg3[%c0, %c0_1] : memref<8x128xf32, #tpu.memory_space<vmem>>, vector<8x128xf32>
    %c0_2 = arith.constant 0 : index
    %c0_3 = arith.constant 0 : index
    %4 = vector.load %arg9[%c0_2, %c0_3] : memref<8x128xf32, #tpu.memory_space<vmem>>, vector<8x128xf32>
    %c0_4 = arith.constant 0 : index
    %c0_5 = arith.constant 0 : index
    %5 = vector.load %arg4[%c0_4, %c0_5] : memref<128x128xf32, #tpu.memory_space<vmem>>, vector<128x128xf32>
    %cst = arith.constant dense<0.000000e+00> : vector<8x128xf32>
    %6 = tpu.matmul %3, %5, %cst {dimension_numbers = #tpu.dot_dimension_numbers<[1], [1], [0], [0], [0, 0, 1, 0], [], []>} : vector<8x128xf32>, vector<128x128xf32>, vector<8x128xf32> -> vector<8x128xf32>
    %7 = arith.addf %4, %6 : vector<8x128xf32>
    %c0_6 = arith.constant 0 : index
    %c0_7 = arith.constant 0 : index
    %8 = vector.load %arg9[%c0_6, %c0_7] : memref<8x128xf32, #tpu.memory_space<vmem>>, vector<8x128xf32>
    tpu.vector_store %arg9[%c0_6, %c0_7], %7 {strides = array<i32>} : memref<8x128xf32, #tpu.memory_space<vmem>>, vector<8x128xf32>,
    %c0_8 = arith.constant 0 : index
    %c0_9 = arith.constant 0 : index
    %9 = vector.load %arg6[%c0_8, %c0_9] : memref<8x128xf32, #tpu.memory_space<vmem>>, vector<8x128xf32>
    %10 = arith.subf %3, %9 : vector<8x128xf32>
    %11 = math.absf %10 : vector<8x128xf32>
    %c0_10 = arith.constant 0 : index
    %12 = memref.load %arg10[%c0_10] : memref<1xf32, #tpu.memory_space<smem>>
    %13 = vector.shape_cast %11 : vector<8x128xf32> to vector<1x8x128xf32>
    %cst_11 = arith.constant dense<0.000000e+00> : vector<1xf32>
    %14 = vector.multi_reduction <add>, %13, %cst_11 [1, 2] : vector<1x8x128xf32> to vector<1xf32>
    %15 = vector.shape_cast %14 : vector<1xf32> to vector<1x1x1xf32>
    %16 = vector.extract %15[0, 0, 0] : f32 from vector<1x1x1xf32>
    %17 = arith.addf %12, %16 : f32
    %c0_12 = arith.constant 0 : index
    %18 = memref.load %arg10[%c0_12] : memref<1xf32, #tpu.memory_space<smem>>
    memref.store %17, %arg10[%c0_12] : memref<1xf32, #tpu.memory_space<smem>>
    %c0_i32_13 = arith.constant 0 : i32
    %19 = arith.cmpi eq, %arg2, %c0_i32_13 : i32
    %20 = arith.extui %19 : i1 to i32
    %c0_i32_14 = arith.constant 0 : i32
    %21 = arith.cmpi ne, %20, %c0_i32_14 : i32
    scf.if %21 {
      %c0_15 = arith.constant 0 : index
      %c0_16 = arith.constant 0 : index
      %22 = vector.load %arg9[%c0_15, %c0_16] : memref<8x128xf32, #tpu.memory_space<vmem>>, vector<8x128xf32>
      %c0_17 = arith.constant 0 : index
      %c0_18 = arith.constant 0 : index
      %23 = vector.load %arg5[%c0_17, %c0_18] : memref<1x128xf32, #tpu.memory_space<vmem>>, vector<1x128xf32>
      %24 = vector.broadcast %23 : vector<1x128xf32> to vector<8x128xf32>
      %25 = arith.addf %22, %24 : vector<8x128xf32>
      %c0_19 = arith.constant 0 : index
      %c0_20 = arith.constant 0 : index
      %26 = vector.load %arg7[%c0_19, %c0_20] : memref<8x128xf32, #tpu.memory_space<vmem>>, vector<8x128xf32>
      tpu.vector_store %arg7[%c0_19, %c0_20], %25 {strides = array<i32>} : memref<8x128xf32, #tpu.memory_space<vmem>>, vector<8x128xf32>,
      %c0_21 = arith.constant 0 : index
      %27 = memref.load %arg10[%c0_21] : memref<1xf32, #tpu.memory_space<smem>>
      %28 = vector.broadcast %27 : f32 to vector<8x128xf32>
      %c0_22 = arith.constant 0 : index
      %c0_23 = arith.constant 0 : index
      %29 = vector.load %arg8[%c0_22, %c0_23] : memref<8x128xf32, #tpu.memory_space<vmem>>, vector<8x128xf32>
      tpu.vector_store %arg8[%c0_22, %c0_23], %28 {strides = array<i32>} : memref<8x128xf32, #tpu.memory_space<vmem>>, vector<8x128xf32>,
    } else {
    }
    return
  }
  func.func @transform_0(%arg0: i32, %arg1: i32, %arg2: i32) -> (i32, i32) {
    %c0_i32 = arith.constant 0 : i32
    return %arg0, %arg2 : i32, i32
  }
  func.func @transform_1(%arg0: i32, %arg1: i32, %arg2: i32) -> (i32, i32) {
    %c0_i32 = arith.constant 0 : i32
    return %arg1, %arg2 : i32, i32
  }
  func.func @transform_2(%arg0: i32, %arg1: i32, %arg2: i32) -> (i32, i32) {
    %c0_i32 = arith.constant 0 : i32
    %c0_i32_0 = arith.constant 0 : i32
    return %c0_i32, %arg1 : i32, i32
  }
  func.func @transform_3(%arg0: i32, %arg1: i32, %arg2: i32) -> (i32, i32) {
    %c0_i32 = arith.constant 0 : i32
    return %arg0, %arg2 : i32, i32
  }
  func.func @transform_4(%arg0: i32, %arg1: i32, %arg2: i32) -> (i32, i32) {
    %c0_i32 = arith.constant 0 : i32
    return %arg0, %arg1 : i32, i32
  }
  func.func @transform_5(%arg0: i32, %arg1: i32, %arg2: i32) -> (i32, i32) {
    %c0_i32 = arith.constant 0 : i32
    return %arg0, %arg1 : i32, i32
  }
}

</mosaic_0001>

<llo_original>
// kernel: tpu_custom_call.1
$region0: #{tpu_custom_call.1}
  #allocation0 [shape = 'u32[]', space=smem, size = 0x4, offset = 0x4, fixed_abs, tag = 'smem constant byte address 0x4 - core index']
  #allocation1 [shape = 'u32[144,128]{1,0:T(1,128)}', space=vmem, size = 0x12000, scoped, tag = 'internal scratch']
  #allocation2 [shape = 'f32[8,128]{1,0:T(8,128)}', space=vmem, size = 0x1000, scoped, tag = 'scratch operand']
  #allocation3 [shape = 'f32[1]{0:T(128)}', space=smem, size = 0x200, scoped, tag = 'scratch operand']
  %s0 = inlined_call_operand.hbm [shape: f32[8,128], index: 0, kind: input, shape index: {}]
  %s1 = inlined_call_operand.hbm [shape: f32[128,128], index: 1, kind: input, shape index: {}]
  %s2 = inlined_call_operand.vmem [shape: f32[1,128], index: 2, kind: input, shape index: {}]
  %s3 = inlined_call_operand.vmem [shape: f32[8,128], index: 3, kind: input, shape index: {}]
  %s4 = inlined_call_operand.hbm [shape: f32[8,128], index: 4, kind: output, shape index: {0}]
  %s5 = inlined_call_operand.hbm [shape: f32[8,128], index: 5, kind: output, shape index: {1}]
  %6 = xla_tuple %s4, %s5
  %s7 = sld [smem:[#allocation0]]
  $region50: #{tpu_custom_call.1} parent=0
    _
  %s9 = ssub.s32 1, %s7
  %s10 = scalar_select 0, %s9, %s7
  $region1: #{tpu_custom_call.1} parent=0
    #allocation4 [shape = 'u8[4096]{0}', space=vmem, size = 0x1000, scoped, tag = 'input window, operand 0, single buffered']
    #allocation5 [shape = 's32[1]{0}', space=sflag, size = 0x4, scoped, tag = 'scoped memory for tpu_custom_call.1']
    #allocation6 [shape = 's32[1]{0}', space=sflag, size = 0x4, scoped, tag = 'scoped memory for tpu_custom_call.1']
    #allocation7 [shape = 'u8[65536]{0}', space=vmem, size = 0x10000, scoped, tag = 'input window, operand 1, single buffered']
    #allocation8 [shape = 's32[1]{0}', space=sflag, size = 0x4, scoped, tag = 'scoped memory for tpu_custom_call.1']
    #allocation9 [shape = 'u8[4096]{0}', space=vmem, size = 0x1000, scoped, tag = 'output window, operand 0, single buffered']
    #allocation10 [shape = 'u8[4096]{0}', space=vmem, size = 0x1000, scoped, tag = 'output window, operand 1, single buffered']
    #allocation11 [shape = 's32[1]{0}', space=sflag, size = 0x4, scoped, tag = 'scoped memory for tpu_custom_call.1']
    %11 = vsyncpa [#allocation5], 0
    %12 = vsyncpa [#allocation8], 0
    %13 = vsyncpa [#allocation6], 0
    %14 = vsyncpa [#allocation11], 0
    // Predicated region
    $region2: #{tpu_custom_call.1} parent=1 // pred_check
      _
    $region3: #{tpu_custom_call.1} parent=1 // pred_check_branch
      %16 = sbr.rel (0) target = $region5
    $region4: #{tpu_custom_call.1} parent=1 // pred_region
      %s18 = ssub.s32 128, 128
      %19 = vsyncadd [#allocation5], %s18
      %s21 = sshll.u32 [#allocation4], 4
      %s22 = int_to_ptr.vmem [resolvable:$true] %s21
      %24 = dma.hbm_to_vmem [thread:$0]  %s0, 128, %s22, [#allocation5]
    $region5: #{tpu_custom_call.1} parent=1 // pred_fallthru
      _
    // Predicated region
    $region6: #{tpu_custom_call.1} parent=1 // pred_check
      _
    $region7: #{tpu_custom_call.1} parent=1 // pred_check_branch
      %26 = sbr.rel (0) target = $region9
    $region8: #{tpu_custom_call.1} parent=1 // pred_region
      %s28 = ssub.s32 2048, 2048
      %29 = vsyncadd [#allocation8], %s28
      %s30 = sshll.u32 [#allocation7], 4
      %s31 = int_to_ptr.vmem [resolvable:$true] %s30
      %36 = dma.hbm_to_vmem [thread:$0]  %s1, 2048, %s31, [#allocation8], 128, 128, 8
    $region9: #{tpu_custom_call.1} parent=1 // pred_fallthru
      _
    // Predicated region
    $region10: #{tpu_custom_call.1} parent=1 // pred_check
      _
    $region11: #{tpu_custom_call.1} parent=1 // pred_check_branch
      %38 = sbr.rel (0) target = $region13
    $region12: #{tpu_custom_call.1} parent=1 // pred_region
      _
    $region13: #{tpu_custom_call.1} parent=1 // pred_fallthru
      _
    // Predicated region
    $region14: #{tpu_custom_call.1} parent=1 // pred_check
      _
    $region15: #{tpu_custom_call.1} parent=1 // pred_check_branch
      %40 = sbr.rel (0) target = $region17
    $region16: #{tpu_custom_call.1} parent=1 // pred_region
      _
    $region17: #{tpu_custom_call.1} parent=1 // pred_fallthru
      _
    // Predicated region
    $region18: #{tpu_custom_call.1} parent=1 // pred_check
      _
    $region19: #{tpu_custom_call.1} parent=1 // pred_check_branch
      %42 = sbr.rel (0) target = $region21
    $region20: #{tpu_custom_call.1} parent=1 // pred_region
      %43 = dma.done [#allocation5], 128
    $region21: #{tpu_custom_call.1} parent=1 // pred_fallthru
      _
    // Predicated region
    $region22: #{tpu_custom_call.1} parent=1 // pred_check
      _
    $region23: #{tpu_custom_call.1} parent=1 // pred_check_branch
      %45 = sbr.rel (0) target = $region25
    $region24: #{tpu_custom_call.1} parent=1 // pred_region
      %46 = dma.done [#allocation8], 2048
    $region25: #{tpu_custom_call.1} parent=1 // pred_fallthru
      _
    %p47 = scmp.eq.s32.totalorder 0, 0
    // Predicated region
    $region26: #{tpu_custom_call.1} parent=1 // pred_check
      %p48 = pneg %p47
    $region27: #{tpu_custom_call.1} parent=1 // pred_check_branch
      %50 = sbr.rel (%p48) target = $region29
    $region28: #{tpu_custom_call.1} parent=1 // pred_region
      %51 = vst [vmem:[#allocation2] sm:$0xff] 0.0
      %s52 = scalar_lea.smem [#allocation3], 0
      %53 = sst [smem:[%s52]] 0.0
    $region29: #{tpu_custom_call.1} parent=1 // pred_fallthru
      _
    %v54 = vld [vmem:[#allocation4] sm:$0xff]
    %v55 = vld [vmem:[#allocation2] sm:$0xff]
    %v56 = vld [vmem:[#allocation7] sm:$0xff]
    %v57 = vld [vmem:[#allocation7 + $0x8] sm:$0xff]
    %v58 = vld [vmem:[#allocation7 + $0x10] sm:$0xff]
    %v59 = vld [vmem:[#allocation7 + $0x18] sm:$0xff]
    %v60 = vld [vmem:[#allocation7 + $0x20] sm:$0xff]
    %v61 = vld [vmem:[#allocation7 + $0x28] sm:$0xff]
    %v62 = vld [vmem:[#allocation7 + $0x30] sm:$0xff]
    %v63 = vld [vmem:[#allocation7 + $0x38] sm:$0xff]
    %v64 = vld [vmem:[#allocation7 + $0x40] sm:$0xff]
    %v65 = vld [vmem:[#allocation7 + $0x48] sm:$0xff]
    %v66 = vld [vmem:[#allocation7 + $0x50] sm:$0xff]
    %v67 = vld [vmem:[#allocation7 + $0x58] sm:$0xff]
    %v68 = vld [vmem:[#allocation7 + $0x60] sm:$0xff]
    %v69 = vld [vmem:[#allocation7 + $0x68] sm:$0xff]
    %v70 = vld [vmem:[#allocation7 + $0x70] sm:$0xff]
    %v71 = vld [vmem:[#allocation7 + $0x78] sm:$0xff]
    %72 = vmatprep.subr.mxu0 0.0
    %73 = vmatpush1.xpose.msra.mxu0 %v56
    %74 = vmatprep.subr.mxu0 0.0
    %75 = vmatpush1.xpose.msra.mxu0 %v57
    %76 = vmatprep.subr.mxu0 0.0
    %77 = vmatpush1.xpose.msra.mxu0 %v58
    %78 = vmatprep.subr.mxu0 0.0
    %79 = vmatpush1.xpose.msra.mxu0 %v59
    %80 = vmatprep.subr.mxu0 0.0
    %81 = vmatpush1.xpose.msra.mxu0 %v60
    %82 = vmatprep.subr.mxu0 0.0
    %83 = vmatpush1.xpose.msra.mxu0 %v61
    %84 = vmatprep.subr.mxu0 0.0
    %85 = vmatpush1.xpose.msra.mxu0 %v62
    %86 = vmatprep.subr.mxu0 0.0
    %87 = vmatpush1.xpose.msra.mxu0 %v63
    %88 = vmatprep.subr.mxu0 0.0
    %89 = vmatpush1.xpose.msra.mxu0 %v64
    %90 = vmatprep.subr.mxu0 0.0
    %91 = vmatpush1.xpose.msra.mxu0 %v65
    %92 = vmatprep.subr.mxu0 0.0
    %93 = vmatpush1.xpose.msra.mxu0 %v66
    %94 = vmatprep.subr.mxu0 0.0
    %95 = vmatpush1.xpose.msra.mxu0 %v67
    %96 = vmatprep.subr.mxu0 0.0
    %97 = vmatpush1.xpose.msra.mxu0 %v68
    %98 = vmatprep.subr.mxu0 0.0
    %99 = vmatpush1.xpose.msra.mxu0 %v69
    %100 = vmatprep.subr.mxu0 0.0
    %101 = vmatpush1.xpose.msra.mxu0 %v70
    %102 = vmatprep.subr.mxu0 0.0
    %103 = vmatpush1.xpose.msra.mxu0 %v71
    %104 = vmatprep.subr.mxu0 0.0
    %105 = vmatpush1.xpose.msra.mxu0 0.0
    %106 = vmatprep.subr.mxu0 0.0
    %107 = vmatpush1.xpose.msra.mxu0 0.0
    %108 = vmatprep.subr.mxu0 0.0
    %109 = vmatpush1.xpose.msra.mxu0 0.0
    %110 = vmatprep.subr.mxu0 0.0
    %111 = vmatpush1.xpose.msra.mxu0 0.0
    %112 = vmatprep.subr.mxu0 0.0
    %113 = vmatpush1.xpose.msra.mxu0 0.0
    %114 = vmatprep.subr.mxu0 0.0
    %115 = vmatpush1.xpose.msra.mxu0 0.0
    %116 = vmatprep.subr.mxu0 0.0
    %117 = vmatpush1.xpose.msra.mxu0 0.0
    %118 = vmatprep.subr.mxu0 0.0
    %119 = vmatpush1.xpose.msra.mxu0 0.0
    %120 = vmatprep.subr.mxu0 0.0
    %121 = vmatpush1.xpose.msra.mxu0 0.0
    %122 = vmatprep.subr.mxu0 0.0
    %123 = vmatpush1.xpose.msra.mxu0 0.0
    %124 = vmatprep.subr.mxu0 0.0
    %125 = vmatpush1.xpose.msra.mxu0 0.0
    %126 = vmatprep.subr.mxu0 0.0
    %127 = vmatpush1.xpose.msra.mxu0 0.0
    %128 = vmatprep.subr.mxu0 0.0
    %129 = vmatpush1.xpose.msra.mxu0 0.0
    %130 = vmatprep.subr.mxu0 0.0
    %131 = vmatpush1.xpose.msra.mxu0 0.0
    %132 = vmatprep.subr.mxu0 0.0
    %133 = vmatpush1.xpose.msra.mxu0 0.0
    %134 = vmatprep.subr.mxu0 0.0
    %135 = vmatpush1.xpose.msra.mxu0 0.0
    %136 = vmatprep.mubr.f32.mxu0 0.0
    %137 = vmatmul.mubr.f32.gmra.mrb[0].mxu0 %v54
    %v138 = vpop.f32.mrb[0].mxu0
    %v139 = vadd.f32 0.0, %v138
    %v140 = vpop.f32.mrb[0].mxu0
    %141 = vdwg.mxu0
    %v142 = vadd.f32 %v55, %v139
    %143 = vst [vmem:[#allocation2] sm:$0xff] %v142
    %v144 = vld [vmem:[%s3] sm:$0xff]
    %v145 = vsub.f32 %v54, %v144
    %v146 = vand.u32 2147483647, %v145
    %s147 = sld [smem:[#allocation3]]
    %148 = vadd.xlane.f32.xlu0 %v146
    %v149 = vpop.xlane.xlu0 %148
    %v150 = vrot.slane %v149, 4
    %v151 = vadd.f32 %v149, %v150
    %v152 = vrot.slane %v151, 2
    %v153 = vadd.f32 %v151, %v152
    %v154 = vrot.slane %v153, 1
    %v155 = vadd.f32 %v153, %v154
    %s156 = vtos %v155
    %s157 = sadd.f32 %s147, %s156
    %s158 = scalar_lea.smem [#allocation3], 0
    %159 = sst [smem:[%s158]] %s157
    // Predicated region
    $region30: #{tpu_custom_call.1} parent=1 // pred_check
      %p160 = pneg %p47
    $region31: #{tpu_custom_call.1} parent=1 // pred_check_branch
      %162 = sbr.rel (%p160) target = $region33
    $region32: #{tpu_custom_call.1} parent=1 // pred_region
      %v163 = vld [vmem:[#allocation2] sm:$0xff]
      %v164 = vld [vmem:[%s2] sm:$0x1]
      %v166 = vlaneseq
      %v167 = vshrl.u32 %v166, 7
      %v168 = vsub.s32 0, %v167
      %v169 = vrot.slane %v164, %v168
      %v171 = vadd.f32 %v163, %v169
      %172 = vst [vmem:[#allocation9] sm:$0xff] %v171
      %s173 = sld [smem:[#allocation3]]
      %v174 = vstv %s173
      %175 = vst [vmem:[#allocation10] sm:$0xff] %v174
    $region33: #{tpu_custom_call.1} parent=1 // pred_fallthru
      _
    // Predicated region
    $region34: #{tpu_custom_call.1} parent=1 // pred_check
      _
    $region35: #{tpu_custom_call.1} parent=1 // pred_check_branch
      %177 = sbr.rel (0) target = $region37
    $region36: #{tpu_custom_call.1} parent=1 // pred_region
      %s179 = ssub.s32 128, 128
      %180 = vsyncadd [#allocation6], %s179
      %s182 = sshll.u32 [#allocation9], 4
      %s183 = int_to_ptr.vmem [resolvable:$true] %s182
      %185 = dma.vmem_to_hbm [thread:$0]  %s183, 128, %s4, [#allocation6]
    $region37: #{tpu_custom_call.1} parent=1 // pred_fallthru
      _
    // Predicated region
    $region38: #{tpu_custom_call.1} parent=1 // pred_check
      _
    $region39: #{tpu_custom_call.1} parent=1 // pred_check_branch
      %187 = sbr.rel (0) target = $region41
    $region40: #{tpu_custom_call.1} parent=1 // pred_region
      %s189 = ssub.s32 128, 128
      %190 = vsyncadd [#allocation11], %s189
      %s192 = sshll.u32 [#allocation10], 4
      %s193 = int_to_ptr.vmem [resolvable:$true] %s192
      %195 = dma.vmem_to_hbm [thread:$0]  %s193, 128, %s5, [#allocation11]
    $region41: #{tpu_custom_call.1} parent=1 // pred_fallthru
      _
    // Predicated region
    $region42: #{tpu_custom_call.1} parent=1 // pred_check
      _
    $region43: #{tpu_custom_call.1} parent=1 // pred_check_branch
      %197 = sbr.rel (0) target = $region45
    $region44: #{tpu_custom_call.1} parent=1 // pred_region
      %198 = dma.done [#allocation6], 128
    $region45: #{tpu_custom_call.1} parent=1 // pred_fallthru
      _
    // Predicated region
    $region46: #{tpu_custom_call.1} parent=1 // pred_check
      _
    $region47: #{tpu_custom_call.1} parent=1 // pred_check_branch
      %200 = sbr.rel (0) target = $region49
    $region48: #{tpu_custom_call.1} parent=1 // pred_region
      %201 = dma.done [#allocation11], 128
    $region49: #{tpu_custom_call.1} parent=1 // pred_fallthru
      _
    %202 = vsyncpa [#allocation5], 1
    %203 = vsyncpa [#allocation8], 1
    %204 = vsyncpa [#allocation6], 1
    %205 = vsyncpa [#allocation11], 1

</llo_original>
